<compile_context>
chip_gen: v7x
topology: tpu7x:2x2x1
jax: 0.10.0
libtpu: 0.0.40
codegen_flags: <defaults>
</compile_context>

<pallas_src>
import functools

import jax
import jax.numpy as jnp
from jax.experimental import pallas as pl
from jax.experimental.pallas import tpu as pltpu


def _round_up(x: int, m: int) -> int:
    return ((x + m - 1) // m) * m


def _pick_batch_tile(B: int, C: int, tt: int, itemsize: int) -> int:
    """Largest batch tile that (a) divides B, (b) fits a conservative VMEM
    budget (double-buffered input + output blocks), and (c) leaves >= 2 grid
    steps when B >= 16 so v7x's two TensorCores both get work."""
    c_sub = _round_up(C, 8)        # sublane padding of the input block
    tt_lane = _round_up(tt, 128)   # lane padding of the input block
    c_lane = _round_up(C, 128)     # lane padding of the output block

    def footprint(tb: int) -> int:
        in_bytes = 2 * tb * c_sub * tt_lane * itemsize            # 2x input bufs
        out_bytes = 2 * _round_up(tb, 8) * c_lane * itemsize      # 2x output bufs
        return in_bytes + out_bytes

    # Fits the v5e 16 MiB scoped-VMEM default; far under v6e 32 MiB default and
    # v7x's 64 MiB physical.
    budget = 16 * 1024 * 1024

    cands = [tb for tb in range(8 * (B // 8), 0, -8) if B % tb == 0]
    if not cands:
        cands = [B]                     # B not a multiple of 8: single full tile
    if B >= 16:
        halved = [tb for tb in cands if tb <= B // 2]
        if halved:                      # keep >= 2 grid steps for megacore
            cands = halved

    for tb in cands:                    # largest-first
        if footprint(tb) <= budget:
            return tb
    return cands[-1]                    # best effort for pathological C*T


def _last_pool_kernel(x_ref, o_ref, *, lane):
    # x_ref : (tb, C, tt) VMEM block; the last timestep sits at lane `lane`.
    # o_ref : (tb, C)     output block (C on the 128-lane axis).
    o_ref[...] = x_ref[:, :, lane]


def last_pool_rnn(x, bidirectional: bool = False):
    """Pallas implementation of LastPoolRNN.forward.  x: (B, C, T) -> (B, C)."""
    B, C, T = x.shape

    # The reference's bidirectional=True branch concatenates an empty slice
    # (x[:, C:, 0]) and is numerically identical to the False branch, so both
    # paths share this kernel.
    # TODO(synk): a "real" bidirectional last-pool would be
    #             cat([x[:, :C//2, -1], x[:, C//2:, 0]], 1).
    del bidirectional

    itemsize = jnp.dtype(x.dtype).itemsize

    # Time chunk actually fetched per step: full T when T < 128, else the
    # 128-wide block containing the last timestep (burst-aligned runs).
    tt = T if T < 128 else 128
    t_blk = (T - 1) // tt       # fixed time-block index holding t = T-1
    lane = (T - 1) % tt         # position of t = T-1 inside that block

    tb = _pick_batch_tile(B, C, tt, itemsize)
    grid = (pl.cdiv(B, tb),)    # tb divides B by construction

    kernel = functools.partial(_last_pool_kernel, lane=lane)

    return pl.pallas_call(
        kernel,
        out_shape=jax.ShapeDtypeStruct((B, C), x.dtype),
        grid_spec=pltpu.PrefetchScalarGridSpec(
            num_scalar_prefetch=0,
            grid=grid,
            in_specs=[pl.BlockSpec((tb, C, tt), lambda i: (i, 0, t_blk))],
            out_specs=pl.BlockSpec((tb, C), lambda i: (i, 0)),
        ),
        compiler_params=pltpu.CompilerParams(
            dimension_semantics=("parallel",),
            vmem_limit_bytes=32 * 1024 * 1024,
        ),
        cost_estimate=pl.CostEstimate(
            flops=0,
            transcendentals=0,
            bytes_accessed=B * C * (tt + 1) * itemsize,
        ),
    )(x)


class LastPoolRNN:
    def __init__(self, bidirectional: bool):
        self.bidirectional = bidirectional

    def __call__(self, x):
        return last_pool_rnn(x, self.bidirectional)


if __name__ == "__main__":
    key = jax.random.PRNGKey(0)

    # Small shape consistent with the module: (batch, channels, seq_len).
    B, C, T = 2, 4, 16
    x = jax.random.normal(key, (B, C, T), dtype=jnp.float32)

    # Non-bidirectional path.
    mod = LastPoolRNN(bidirectional=False)
    out = jax.block_until_ready(mod(x))
    ref = x[:, :, -1]
    assert out.shape == (B, C)
    assert jnp.allclose(out, ref), "mismatch vs reference (bidirectional=False)"

    # Bidirectional path (reference concatenates an empty slice -> same result).
    mod_bi = LastPoolRNN(bidirectional=True)
    out_bi = jax.block_until_ready(mod_bi(x))
    ref_bi = jnp.concatenate([x[:, :C, -1], x[:, C:, 0]], axis=1)
    assert out_bi.shape == (B, C)
    assert jnp.allclose(out_bi, ref_bi), "mismatch vs reference (bidirectional=True)"

    # Larger shape exercising the T >= 128 path (only the last 128-wide time
    # block is fetched) and a multi-step batch grid.
    key2 = jax.random.PRNGKey(1)
    B2, C2, T2 = 16, 8, 256
    x2 = jax.random.normal(key2, (B2, C2, T2), dtype=jnp.float32)
    out2 = jax.block_until_ready(last_pool_rnn(x2))
    assert out2.shape == (B2, C2)
    assert jnp.allclose(out2, x2[:, :, -1]), "mismatch vs reference (large shape)"

    print("KERNEL_OK")
</pallas_src>

<mosaic_0001>
module attributes {stable_mosaic.version = 11 : i64} {
  func.func @_last_pool_kernel(%arg0: i32, %arg1: memref<2x4x16xf32, #tpu.memory_space<vmem>>, %arg2: memref<2x4xf32, #tpu.memory_space<vmem>>) attributes {dimension_semantics = [#tpu.dimension_semantics<parallel>], iteration_bounds = array<i64: 1>, scalar_prefetch = 0 : i64, scratch_operands = 0 : i64, tpu.core_type = #tpu.core_type<tc>, window_params = [{transform_indices = @transform_0, window_bounds = array<i64: 2, 4, 16>}, {transform_indices = @transform_1, window_bounds = array<i64: 2, 4>}]} {
    %c0 = arith.constant 0 : index
    %c0_0 = arith.constant 0 : index
    %c15 = arith.constant 15 : index
    %0 = vector.load %arg1[%c0, %c0_0, %c15] : memref<2x4x16xf32, #tpu.memory_space<vmem>>, vector<2x4x1xf32>
    %1 = vector.shape_cast %0 : vector<2x4x1xf32> to vector<2x4xf32>
    %c0_1 = arith.constant 0 : index
    %c0_2 = arith.constant 0 : index
    %2 = vector.load %arg2[%c0_1, %c0_2] : memref<2x4xf32, #tpu.memory_space<vmem>>, vector<2x4xf32>
    tpu.vector_store %arg2[%c0_1, %c0_2], %1 {strides = array<i32>} : memref<2x4xf32, #tpu.memory_space<vmem>>, vector<2x4xf32>,
    return
  }
  func.func @transform_0(%arg0: i32) -> (i32, i32, i32) {
    %c0_i32 = arith.constant 0 : i32
    %c0_i32_0 = arith.constant 0 : i32
    %c0_i32_1 = arith.constant 0 : i32
    return %arg0, %c0_i32, %c0_i32_0 : i32, i32, i32
  }
  func.func @transform_1(%arg0: i32) -> (i32, i32) {
    %c0_i32 = arith.constant 0 : i32
    %c0_i32_0 = arith.constant 0 : i32
    return %arg0, %c0_i32 : i32, i32
  }
}

</mosaic_0001>

<llo_original>
// kernel: tpu_custom_call.1
$region0: #{tpu_custom_call.1}
  #allocation0 [shape = 'u32[]', space=smem, size = 0x4, offset = 0x4, fixed_abs, tag = 'smem constant byte address 0x4 - core index']
  #allocation1 [shape = 'u32[144,128]{1,0:T(1,128)}', space=vmem, size = 0x12000, scoped, tag = 'internal scratch']
  %s0 = inlined_call_operand.hbm [shape: f32[2,4,16], index: 0, kind: input, shape index: {}]
  %s1 = inlined_call_operand.hbm [shape: f32[2,4], index: 1, kind: output, shape index: {}]
  %s2 = sld [smem:[#allocation0]]
  $region18: #{tpu_custom_call.1} parent=0
    _
  %s4 = ssub.s32 1, %s2
  %s5 = scalar_select 0, %s4, %s2
  $region1: #{tpu_custom_call.1} parent=0
    #allocation2 [shape = 'u8[4096]{0}', space=vmem, size = 0x1000, scoped, tag = 'input window, operand 0, single buffered']
    #allocation3 [shape = 's32[1]{0}', space=sflag, size = 0x4, scoped, tag = 'scoped memory for tpu_custom_call.1']
    #allocation4 [shape = 's32[1]{0}', space=sflag, size = 0x4, scoped, tag = 'scoped memory for tpu_custom_call.1']
    #allocation5 [shape = 'u8[1024]{0}', space=vmem, size = 0x400, scoped, tag = 'output window, operand 0, single buffered']
    %6 = vsyncpa [#allocation3], 0
    %7 = vsyncpa [#allocation4], 0
    // Predicated region
    $region2: #{tpu_custom_call.1} parent=1 // pred_check
      _
    $region3: #{tpu_custom_call.1} parent=1 // pred_check_branch
      %9 = sbr.rel (0) target = $region5
    $region4: #{tpu_custom_call.1} parent=1 // pred_region
      %s11 = ssub.s32 128, 128
      %12 = vsyncadd [#allocation3], %s11
      %s13 = sshll.u32 [#allocation2], 4
      %s14 = int_to_ptr.vmem [resolvable:$true] %s13
      %19 = dma.hbm_to_vmem [thread:$0]  %s0, 128, %s14, [#allocation3], 64, 64, 4
    $region5: #{tpu_custom_call.1} parent=1 // pred_fallthru
      _
    // Predicated region
    $region6: #{tpu_custom_call.1} parent=1 // pred_check
      _
    $region7: #{tpu_custom_call.1} parent=1 // pred_check_branch
      %21 = sbr.rel (0) target = $region9
    $region8: #{tpu_custom_call.1} parent=1 // pred_region
      %22 = dma.done [#allocation3], 128
    $region9: #{tpu_custom_call.1} parent=1 // pred_fallthru
      _
    %v23 = vld [vmem:[#allocation2] sm:$0xf]
    %v24 = vld [vmem:[#allocation2 + $0x4] sm:$0xf]
    %27 = vset.pattern.permute.xlu0 15
    %28 = vperm.xlu0 %27, %v23
    %v29 = vpop.permute.xlu0 %28
    %30 = vset.pattern.permute.xlu0 15
    %31 = vperm.xlu0 %30, %v24
    %v32 = vpop.permute.xlu0 %31
    %v33 = vlaneseq
    %v34 = vand.u32 %v33, 127
    %v35 = vlaneseq
    %v36 = vshrl.u32 %v35, 7
    %v37 = vsub.s32 %v34, %v36
    %v38 = vrot.slane %v29, %v37
    %v39 = vlaneseq
    %v40 = vshrl.u32 %v39, 7
    %v41 = vsub.s32 %v34, %v40
    %v42 = vrot.slane %v32, %v41
    %vm43 = vcmask 1041409
    %v44 = vsel %vm43, %v42, %v38
    %vm46 = vcmask 25600
    %47 = vst.msk [vmem:[#allocation5] sm:$0x3] %vm46, %v44
    // Predicated region
    $region10: #{tpu_custom_call.1} parent=1 // pred_check
      _
    $region11: #{tpu_custom_call.1} parent=1 // pred_check_branch
      %49 = sbr.rel (0) target = $region13
    $region12: #{tpu_custom_call.1} parent=1 // pred_region
      %s51 = ssub.s32 32, 32
      %52 = vsyncadd [#allocation4], %s51
      %s54 = sshll.u32 [#allocation5], 4
      %s55 = int_to_ptr.vmem [resolvable:$true] %s54
      %57 = dma.vmem_to_hbm [thread:$0]  %s55, 32, %s1, [#allocation4]
    $region13: #{tpu_custom_call.1} parent=1 // pred_fallthru
      _
    // Predicated region
    $region14: #{tpu_custom_call.1} parent=1 // pred_check
      _
    $region15: #{tpu_custom_call.1} parent=1 // pred_check_branch
      %59 = sbr.rel (0) target = $region17
    $region16: #{tpu_custom_call.1} parent=1 // pred_region
      %60 = dma.done [#allocation4], 32
    $region17: #{tpu_custom_call.1} parent=1 // pred_fallthru
      _
    %61 = vsyncpa [#allocation3], 1
    %62 = vsyncpa [#allocation4], 1

</llo_original>
